<compile_context>
chip_gen: v7x
topology: tpu7x:2x2x1
jax: 0.10.0
libtpu: 0.0.40
codegen_flags: <defaults>
</compile_context>

<pallas_src>
import functools

import jax
import jax.numpy as jnp
from jax.experimental import pallas as pl
from jax.experimental.pallas import tpu as pltpu

LANE = 128        # TPU lane width
TB_MAX = 1024     # max batch-tile rows (review: 1024-2048; 1024 keeps VMEM tiny)
SPLIT_MIN_B = 256 # batches >= this are split into >=2 tiles so both v7x TCs are fed


def _round_up(n, m):
    return ((n + m - 1) // m) * m


def _cdiv(a, b):
    return (a + b - 1) // b


def dqn_mlp_kernel(x_ref, w1_ref, b1_ref, w2_ref, b2_ref, w3_ref, b3_ref,
                   o_ref, xpad_ref, *, in_size, out_size, needs_pad):
    """Fused 3-layer MLP on one (TB, in_size) batch tile.

    x_ref      : (TB, in_size) f32   -- raw input tile (cast/pad done here)
    w*_ref     : bf16 weights, K/N padded to 128 where needed (done once outside)
    b*_ref     : f32 biases (1, H) / (1, Np)
    o_ref      : (TB, out_size) f32  -- real-width output (no padded columns)
    xpad_ref   : (TB, Kp) bf16 scratch used to zero-pad x up to 128 K-columns
    """
    if needs_pad:
        # In-kernel cast + zero-pad: cheap VMEM traffic, hidden under the MXU.
        xpad_ref[...] = jnp.zeros_like(xpad_ref)
        xpad_ref[:, :in_size] = x_ref[...].astype(jnp.bfloat16)
        x = xpad_ref[...]                                            # (TB, Kp) bf16
    else:
        x = x_ref[...].astype(jnp.bfloat16)                          # already 128-mult

    # Layer 1: (TB, Kp) @ (Kp, H) -> f32 acc, bias+ReLU in f32, bf16 for next MXU.
    h1 = jnp.dot(x, w1_ref[...], preferred_element_type=jnp.float32) + b1_ref[...]
    h1 = jnp.maximum(h1, 0.0).astype(jnp.bfloat16)                   # (TB, H)

    # Layer 2: (TB, H) @ (H, H).
    h2 = jnp.dot(h1, w2_ref[...], preferred_element_type=jnp.float32) + b2_ref[...]
    h2 = jnp.maximum(h2, 0.0).astype(jnp.bfloat16)                   # (TB, H)

    # Layer 3: (TB, H) @ (H, Np) on the MXU, then store only the real columns.
    y = jnp.dot(h2, w3_ref[...], preferred_element_type=jnp.float32) + b3_ref[...]
    o_ref[...] = y[:, :out_size].astype(o_ref.dtype)                 # (TB, out_size)


def prepare_params(params):
    """One-time pad + bf16 cast of the weights for the kernel.

    Call once after init / after each weight update -- NOT on every forward.
    """
    in_size = params["w1"].shape[0]
    hidden = params["w1"].shape[1]
    out_size = params["w3"].shape[1]
    Kp = _round_up(max(in_size, LANE), LANE)      # pad layer-1 K to 128
    Np = _round_up(max(out_size, LANE), LANE)     # pad layer-3 N to 128 (MXU only)

    w1 = jnp.pad(params["w1"], ((0, Kp - in_size), (0, 0))).astype(jnp.bfloat16)
    w2 = params["w2"].astype(jnp.bfloat16)
    w3 = jnp.pad(params["w3"], ((0, 0), (0, Np - out_size))).astype(jnp.bfloat16)
    b1 = params["b1"].reshape(1, hidden).astype(jnp.float32)
    b2 = params["b2"].reshape(1, hidden).astype(jnp.float32)
    b3 = jnp.pad(params["b3"].reshape(1, out_size),
                 ((0, 0), (0, Np - out_size))).astype(jnp.float32)
    return {"w1": w1, "b1": b1, "w2": w2, "b2": b2, "w3": w3, "b3": b3}


@functools.partial(jax.jit, static_argnames=("out_size",))
def dqn_forward(x, prep, out_size):
    """x: (B, input_size) float32. prep: output of prepare_params. -> (B, out_size) f32."""
    B, in_size = x.shape
    Kp, hidden = prep["w1"].shape
    Np = prep["w3"].shape[1]
    assert Kp >= in_size and Np >= out_size

    # --- batch tiling: big tiles, even tile count for v7x's 2 TensorCores ------
    if B > TB_MAX:
        n_tiles = 2 * _cdiv(B, 2 * TB_MAX)             # even count, <= TB_MAX rows/tile
        TB = _round_up(_cdiv(B, n_tiles), 16)           # 16 = bf16 sublane packing
    elif B >= SPLIT_MIN_B:
        n_tiles = 2                                      # keep both TCs busy on v7x
        TB = _round_up(_cdiv(B, 2), 16)
    else:
        n_tiles = 1
        TB = _round_up(B, 16)
    Bp = TB * n_tiles

    # Only row-pad x (tiny); column pad + bf16 cast happen inside the kernel.
    x_p = jnp.pad(x, ((0, Bp - B), (0, 0)))

    # --- BlockSpecs: tile the batch, keep weights/biases VMEM-resident ---------
    x_spec = pl.BlockSpec((TB, in_size), lambda i: (i, 0))
    o_spec = pl.BlockSpec((TB, out_size), lambda i: (i, 0))
    w1_spec = pl.BlockSpec((Kp, hidden), lambda i: (0, 0))
    b1_spec = pl.BlockSpec((1, hidden), lambda i: (0, 0))
    w2_spec = pl.BlockSpec((hidden, hidden), lambda i: (0, 0))
    b2_spec = pl.BlockSpec((1, hidden), lambda i: (0, 0))
    w3_spec = pl.BlockSpec((hidden, Np), lambda i: (0, 0))
    b3_spec = pl.BlockSpec((1, Np), lambda i: (0, 0))

    kernel = functools.partial(
        dqn_mlp_kernel,
        in_size=in_size, out_size=out_size, needs_pad=(in_size != Kp))

    flops = 2 * Bp * (Kp * hidden + hidden * hidden + hidden * Np)
    bytes_accessed = (
        Bp * in_size * 4                                   # x read (f32)
        + 2 * (Kp * hidden + hidden * hidden + hidden * Np)  # bf16 weights
        + 4 * (hidden + hidden + Np)                       # f32 biases
        + Bp * out_size * 4                                # real-width f32 output
    )

    out_padded = pl.pallas_call(
        kernel,
        out_shape=jax.ShapeDtypeStruct((Bp, out_size), jnp.float32),
        grid=(n_tiles,),
        in_specs=[x_spec, w1_spec, b1_spec, w2_spec, b2_spec, w3_spec, b3_spec],
        out_specs=o_spec,
        scratch_shapes=[pltpu.VMEM((TB, Kp), jnp.bfloat16)],   # in-kernel x pad buffer
        compiler_params=pltpu.CompilerParams(
            dimension_semantics=("parallel",),   # batch tiles shard across v7x's 2 TCs
        ),
        cost_estimate=pl.CostEstimate(
            flops=flops, transcendentals=0, bytes_accessed=bytes_accessed),
    )(x_p, prep["w1"], prep["b1"], prep["w2"], prep["b2"], prep["w3"], prep["b3"])

    # Only the (at most 15) padded batch rows are trimmed; columns are already real width.
    return out_padded[:B]


def init_params(key, input_size, output_size, hidden=256):
    """Deterministic init mirroring nn.Linear's U(-1/sqrt(fan_in), 1/sqrt(fan_in))."""
    def linear(key, fan_in, fan_out):
        kw, kb = jax.random.split(key)
        bound = 1.0 / jnp.sqrt(fan_in)
        # stored transposed: (in_features, out_features)
        w = jax.random.uniform(kw, (fan_in, fan_out), jnp.float32, -bound, bound)
        b = jax.random.uniform(kb, (1, fan_out), jnp.float32, -bound, bound)
        return w, b

    k1, k2, k3 = jax.random.split(key, 3)
    w1, b1 = linear(k1, input_size, hidden)
    w2, b2 = linear(k2, hidden, hidden)
    w3, b3 = linear(k3, hidden, output_size)
    return {"w1": w1, "b1": b1, "w2": w2, "b2": b2, "w3": w3, "b3": b3}


def reference_forward(x, params):
    """Reference with the same bf16 input/weight quantization, f32 accumulation."""
    def q(a):
        return a.astype(jnp.bfloat16).astype(jnp.float32)

    h1 = jnp.maximum(q(x) @ q(params["w1"]) + params["b1"], 0.0)
    h2 = jnp.maximum(q(h1) @ q(params["w2"]) + params["b2"], 0.0)
    return q(h2) @ q(params["w3"]) + params["b3"]


if __name__ == "__main__":
    key = jax.random.PRNGKey(0)
    kx, kp = jax.random.split(key)

    batch = 8
    input_size = 32
    output_size = 8

    x = jax.random.normal(kx, (batch, input_size), jnp.float32)
    params = init_params(kp, input_size, output_size)
    prep = prepare_params(params)          # one-time weight pad/cast (not per call)

    out = dqn_forward(x, prep, out_size=output_size)
    out = jax.block_until_ready(out)

    ref = reference_forward(x, params)
    assert out.shape == (batch, output_size), out.shape
    assert jnp.allclose(out, ref, atol=2e-2, rtol=2e-2), "mismatch vs reference"

    print("KERNEL_OK")
</pallas_src>

<mosaic_0001>
module attributes {stable_mosaic.version = 11 : i64} {
  func.func @dqn_mlp_kernel(%arg0: i32, %arg1: memref<16x32xf32, #tpu.memory_space<vmem>>, %arg2: memref<128x256xbf16, #tpu.memory_space<vmem>>, %arg3: memref<1x256xf32, #tpu.memory_space<vmem>>, %arg4: memref<256x256xbf16, #tpu.memory_space<vmem>>, %arg5: memref<1x256xf32, #tpu.memory_space<vmem>>, %arg6: memref<256x128xbf16, #tpu.memory_space<vmem>>, %arg7: memref<1x128xf32, #tpu.memory_space<vmem>>, %arg8: memref<16x8xf32, #tpu.memory_space<vmem>>, %arg9: memref<16x128xbf16, #tpu.memory_space<vmem>>) attributes {dimension_semantics = [#tpu.dimension_semantics<parallel>], iteration_bounds = array<i64: 1>, scalar_prefetch = 0 : i64, scratch_operands = 1 : i64, tpu.core_type = #tpu.core_type<tc>, window_params = [{transform_indices = @transform_0, window_bounds = array<i64: 16, 32>}, {pipeline_mode = #tpu.pipeline_mode<synchronous>, transform_indices = @transform_1, window_bounds = array<i64: 128, 256>}, {pipeline_mode = #tpu.pipeline_mode<synchronous>, transform_indices = @transform_2, window_bounds = array<i64: 1, 256>}, {pipeline_mode = #tpu.pipeline_mode<synchronous>, transform_indices = @transform_3, window_bounds = array<i64: 256, 256>}, {pipeline_mode = #tpu.pipeline_mode<synchronous>, transform_indices = @transform_4, window_bounds = array<i64: 1, 256>}, {pipeline_mode = #tpu.pipeline_mode<synchronous>, transform_indices = @transform_5, window_bounds = array<i64: 256, 128>}, {pipeline_mode = #tpu.pipeline_mode<synchronous>, transform_indices = @transform_6, window_bounds = array<i64: 1, 128>}, {transform_indices = @transform_7, window_bounds = array<i64: 16, 8>}]} {
    %cst = arith.constant 0.000000e+00 : bf16
    %0 = vector.broadcast %cst : bf16 to vector<16x128xbf16>
    %c0 = arith.constant 0 : index
    %c0_0 = arith.constant 0 : index
    %1 = vector.load %arg9[%c0, %c0_0] : memref<16x128xbf16, #tpu.memory_space<vmem>>, vector<16x128xbf16>
    tpu.vector_store %arg9[%c0, %c0_0], %0 {strides = array<i32>} : memref<16x128xbf16, #tpu.memory_space<vmem>>, vector<16x128xbf16>,
    %c0_1 = arith.constant 0 : index
    %c0_2 = arith.constant 0 : index
    %2 = vector.load %arg1[%c0_1, %c0_2] : memref<16x32xf32, #tpu.memory_space<vmem>>, vector<16x32xf32>
    %3 = arith.truncf %2 : vector<16x32xf32> to vector<16x32xbf16>
    %c0_3 = arith.constant 0 : index
    %c0_4 = arith.constant 0 : index
    %4 = vector.load %arg9[%c0_3, %c0_4] : memref<16x128xbf16, #tpu.memory_space<vmem>>, vector<16x32xbf16>
    tpu.vector_store %arg9[%c0_3, %c0_4], %3 {strides = array<i32>} : memref<16x128xbf16, #tpu.memory_space<vmem>>, vector<16x32xbf16>,
    %c0_5 = arith.constant 0 : index
    %c0_6 = arith.constant 0 : index
    %5 = vector.load %arg9[%c0_5, %c0_6] : memref<16x128xbf16, #tpu.memory_space<vmem>>, vector<16x128xbf16>
    %c0_7 = arith.constant 0 : index
    %c0_8 = arith.constant 0 : index
    %6 = vector.load %arg2[%c0_7, %c0_8] : memref<128x256xbf16, #tpu.memory_space<vmem>>, vector<128x256xbf16>
    %cst_9 = arith.constant dense<0.000000e+00> : vector<16x256xf32>
    %7 = tpu.matmul %5, %6, %cst_9 {dimension_numbers = #tpu.dot_dimension_numbers<[1], [0], [0], [1], [0, 0, 1, 1], [], []>} : vector<16x128xbf16>, vector<128x256xbf16>, vector<16x256xf32> -> vector<16x256xf32>
    %c0_10 = arith.constant 0 : index
    %c0_11 = arith.constant 0 : index
    %8 = vector.load %arg3[%c0_10, %c0_11] : memref<1x256xf32, #tpu.memory_space<vmem>>, vector<1x256xf32>
    %9 = vector.broadcast %8 : vector<1x256xf32> to vector<16x256xf32>
    %10 = arith.addf %7, %9 : vector<16x256xf32>
    %cst_12 = arith.constant 0.000000e+00 : f32
    %11 = vector.broadcast %cst_12 : f32 to vector<16x256xf32>
    %12 = arith.maximumf %10, %11 : vector<16x256xf32>
    %13 = arith.truncf %12 : vector<16x256xf32> to vector<16x256xbf16>
    %c0_13 = arith.constant 0 : index
    %c0_14 = arith.constant 0 : index
    %14 = vector.load %arg4[%c0_13, %c0_14] : memref<256x256xbf16, #tpu.memory_space<vmem>>, vector<256x256xbf16>
    %cst_15 = arith.constant dense<0.000000e+00> : vector<16x256xf32>
    %15 = tpu.matmul %13, %14, %cst_15 {dimension_numbers = #tpu.dot_dimension_numbers<[1], [0], [0], [1], [0, 0, 1, 1], [], []>} : vector<16x256xbf16>, vector<256x256xbf16>, vector<16x256xf32> -> vector<16x256xf32>
    %c0_16 = arith.constant 0 : index
    %c0_17 = arith.constant 0 : index
    %16 = vector.load %arg5[%c0_16, %c0_17] : memref<1x256xf32, #tpu.memory_space<vmem>>, vector<1x256xf32>
    %17 = vector.broadcast %16 : vector<1x256xf32> to vector<16x256xf32>
    %18 = arith.addf %15, %17 : vector<16x256xf32>
    %cst_18 = arith.constant 0.000000e+00 : f32
    %19 = vector.broadcast %cst_18 : f32 to vector<16x256xf32>
    %20 = arith.maximumf %18, %19 : vector<16x256xf32>
    %21 = arith.truncf %20 : vector<16x256xf32> to vector<16x256xbf16>
    %c0_19 = arith.constant 0 : index
    %c0_20 = arith.constant 0 : index
    %22 = vector.load %arg6[%c0_19, %c0_20] : memref<256x128xbf16, #tpu.memory_space<vmem>>, vector<256x128xbf16>
    %cst_21 = arith.constant dense<0.000000e+00> : vector<16x128xf32>
    %23 = tpu.matmul %21, %22, %cst_21 {dimension_numbers = #tpu.dot_dimension_numbers<[1], [0], [0], [1], [0, 0, 1, 1], [], []>} : vector<16x256xbf16>, vector<256x128xbf16>, vector<16x128xf32> -> vector<16x128xf32>
    %c0_22 = arith.constant 0 : index
    %c0_23 = arith.constant 0 : index
    %24 = vector.load %arg7[%c0_22, %c0_23] : memref<1x128xf32, #tpu.memory_space<vmem>>, vector<1x128xf32>
    %25 = vector.broadcast %24 : vector<1x128xf32> to vector<16x128xf32>
    %26 = arith.addf %23, %25 : vector<16x128xf32>
    %27 = vector.extract_strided_slice %26 {offsets = [0, 0], sizes = [16, 8], strides = [1, 1]} : vector<16x128xf32> to vector<16x8xf32>
    %c0_24 = arith.constant 0 : index
    %c0_25 = arith.constant 0 : index
    %28 = vector.load %arg8[%c0_24, %c0_25] : memref<16x8xf32, #tpu.memory_space<vmem>>, vector<16x8xf32>
    tpu.vector_store %arg8[%c0_24, %c0_25], %27 {strides = array<i32>} : memref<16x8xf32, #tpu.memory_space<vmem>>, vector<16x8xf32>,
    return
  }
  func.func @transform_0(%arg0: i32) -> (i32, i32) {
    %c0_i32 = arith.constant 0 : i32
    %c0_i32_0 = arith.constant 0 : i32
    return %arg0, %c0_i32 : i32, i32
  }
  func.func @transform_1(%arg0: i32) -> (i32, i32) {
    %c0_i32 = arith.constant 0 : i32
    %c0_i32_0 = arith.constant 0 : i32
    %c0_i32_1 = arith.constant 0 : i32
    return %c0_i32, %c0_i32_0 : i32, i32
  }
  func.func @transform_2(%arg0: i32) -> (i32, i32) {
    %c0_i32 = arith.constant 0 : i32
    %c0_i32_0 = arith.constant 0 : i32
    %c0_i32_1 = arith.constant 0 : i32
    return %c0_i32, %c0_i32_0 : i32, i32
  }
  func.func @transform_3(%arg0: i32) -> (i32, i32) {
    %c0_i32 = arith.constant 0 : i32
    %c0_i32_0 = arith.constant 0 : i32
    %c0_i32_1 = arith.constant 0 : i32
    return %c0_i32, %c0_i32_0 : i32, i32
  }
  func.func @transform_4(%arg0: i32) -> (i32, i32) {
    %c0_i32 = arith.constant 0 : i32
    %c0_i32_0 = arith.constant 0 : i32
    %c0_i32_1 = arith.constant 0 : i32
    return %c0_i32, %c0_i32_0 : i32, i32
  }
  func.func @transform_5(%arg0: i32) -> (i32, i32) {
    %c0_i32 = arith.constant 0 : i32
    %c0_i32_0 = arith.constant 0 : i32
    %c0_i32_1 = arith.constant 0 : i32
    return %c0_i32, %c0_i32_0 : i32, i32
  }
  func.func @transform_6(%arg0: i32) -> (i32, i32) {
    %c0_i32 = arith.constant 0 : i32
    %c0_i32_0 = arith.constant 0 : i32
    %c0_i32_1 = arith.constant 0 : i32
    return %c0_i32, %c0_i32_0 : i32, i32
  }
  func.func @transform_7(%arg0: i32) -> (i32, i32) {
    %c0_i32 = arith.constant 0 : i32
    %c0_i32_0 = arith.constant 0 : i32
    return %arg0, %c0_i32 : i32, i32
  }
}

</mosaic_0001>

<llo_original>
// kernel: dqn_forward.1
$region0: #{dqn_forward.1}
  #allocation0 [shape = 'u32[]', space=smem, size = 0x4, offset = 0x4, fixed_abs, tag = 'smem constant byte address 0x4 - core index']
  #allocation1 [shape = 'u32[144,128]{1,0:T(1,128)}', space=vmem, size = 0x12000, scoped, tag = 'internal scratch']
  #allocation2 [shape = 'bf16[16,128]{1,0:T(16,128)(2,1)}', space=vmem, size = 0x1000, scoped, tag = 'scratch operand']
  %s0 = inlined_call_operand.vmem [shape: f32[16,32], index: 0, kind: input, shape index: {}]
  %s1 = inlined_call_operand.hbm [shape: bf16[128,256], index: 1, kind: input, shape index: {}]
  %s2 = inlined_call_operand.vmem [shape: f32[1,256], index: 2, kind: input, shape index: {}]
  %s3 = inlined_call_operand.hbm [shape: bf16[256,256], index: 3, kind: input, shape index: {}]
  %s4 = inlined_call_operand.vmem [shape: f32[1,256], index: 4, kind: input, shape index: {}]
  %s5 = inlined_call_operand.hbm [shape: bf16[256,128], index: 5, kind: input, shape index: {}]
  %s6 = inlined_call_operand.vmem [shape: f32[1,128], index: 6, kind: input, shape index: {}]
  %s7 = inlined_call_operand.vmem [shape: f32[16,8], index: 7, kind: output, shape index: {}]
  %s8 = sld [smem:[#allocation0]]
  $region50: #{dqn_forward.1} parent=0
    _
  %s10 = ssub.s32 1, %s8
  %s11 = scalar_select 0, %s10, %s8
  $region1: #{dqn_forward.1} parent=0
    #allocation3 [shape = 'u8[65536]{0}', space=vmem, size = 0x10000, scoped, tag = 'input window, operand 1, single buffered']
    #allocation4 [shape = 's32[1]{0}', space=sflag, size = 0x4, scoped, tag = 'scoped memory for dqn_forward.1']
    #allocation5 [shape = 'u8[131072]{0}', space=vmem, size = 0x20000, scoped, tag = 'input window, operand 3, single buffered']
    #allocation6 [shape = 's32[1]{0}', space=sflag, size = 0x4, scoped, tag = 'scoped memory for dqn_forward.1']
    #allocation7 [shape = 'u8[65536]{0}', space=vmem, size = 0x10000, scoped, tag = 'input window, operand 5, single buffered']
    %12 = vsyncpa [#allocation4], 0
    %13 = vsyncpa [#allocation6], 0
    // Predicated region
    $region2: #{dqn_forward.1} parent=1 // pred_check
      _
    $region3: #{dqn_forward.1} parent=1 // pred_check_branch
      %15 = sbr.rel (0) target = $region5
    $region4: #{dqn_forward.1} parent=1 // pred_region
      _
    $region5: #{dqn_forward.1} parent=1 // pred_fallthru
      _
    // Predicated region
    $region6: #{dqn_forward.1} parent=1 // pred_check
      _
    $region7: #{dqn_forward.1} parent=1 // pred_check_branch
      %17 = sbr.rel (0) target = $region9
    $region8: #{dqn_forward.1} parent=1 // pred_region
      %s19 = ssub.s32 2048, 2048
      %20 = vsyncadd [#allocation4], %s19
      %s21 = sshll.u32 [#allocation3], 4
      %s22 = int_to_ptr.vmem [resolvable:$true] %s21
      %27 = dma.hbm_to_vmem [thread:$0]  %s1, 2048, %s22, [#allocation4], 128, 128, 8
    $region9: #{dqn_forward.1} parent=1 // pred_fallthru
      _
    // Predicated region
    $region10: #{dqn_forward.1} parent=1 // pred_check
      _
    $region11: #{dqn_forward.1} parent=1 // pred_check_branch
      %29 = sbr.rel (0) target = $region13
    $region12: #{dqn_forward.1} parent=1 // pred_region
      _
    $region13: #{dqn_forward.1} parent=1 // pred_fallthru
      _
    // Predicated region
    $region14: #{dqn_forward.1} parent=1 // pred_check
      _
    $region15: #{dqn_forward.1} parent=1 // pred_check_branch
      %31 = sbr.rel (0) target = $region17
    $region16: #{dqn_forward.1} parent=1 // pred_region
      %s33 = ssub.s32 4096, 4096
      %34 = vsyncadd [#allocation6], %s33
      %s35 = sshll.u32 [#allocation5], 4
      %s36 = int_to_ptr.vmem [resolvable:$true] %s35
      %41 = dma.hbm_to_vmem [thread:$0]  %s3, 4096, %s36, [#allocation6], 128, 128, 8
    $region17: #{dqn_forward.1} parent=1 // pred_fallthru
      _
    // Predicated region
    $region18: #{dqn_forward.1} parent=1 // pred_check
      _
    $region19: #{dqn_forward.1} parent=1 // pred_check_branch
      %43 = sbr.rel (0) target = $region21
    $region20: #{dqn_forward.1} parent=1 // pred_region
      _
    $region21: #{dqn_forward.1} parent=1 // pred_fallthru
      _
    // Predicated region
    $region22: #{dqn_forward.1} parent=1 // pred_check
      _
    $region23: #{dqn_forward.1} parent=1 // pred_check_branch
      %45 = sbr.rel (0) target = $region25
    $region24: #{dqn_forward.1} parent=1 // pred_region
      %s47 = ssub.s32 2048, 2048
      %48 = vsyncadd [#allocation6], %s47
      %s49 = sshll.u32 [#allocation7], 4
      %s50 = int_to_ptr.vmem [resolvable:$true] %s49
      %55 = dma.hbm_to_vmem [thread:$0]  %s5, 2048, %s50, [#allocation6], 64, 64, 4
    $region25: #{dqn_forward.1} parent=1 // pred_fallthru
      _
    // Predicated region
    $region26: #{dqn_forward.1} parent=1 // pred_check
      _
    $region27: #{dqn_forward.1} parent=1 // pred_check_branch
      %57 = sbr.rel (0) target = $region29
    $region28: #{dqn_forward.1} parent=1 // pred_region
      _
    $region29: #{dqn_forward.1} parent=1 // pred_fallthru
      _
    // Predicated region
    $region30: #{dqn_forward.1} parent=1 // pred_check
      _
    $region31: #{dqn_forward.1} parent=1 // pred_check_branch
      %59 = sbr.rel (0) target = $region33
    $region32: #{dqn_forward.1} parent=1 // pred_region
      %60 = dma.done [#allocation4], 2048
    $region33: #{dqn_forward.1} parent=1 // pred_fallthru
      _
    // Predicated region
    $region34: #{dqn_forward.1} parent=1 // pred_check
      _
    $region35: #{dqn_forward.1} parent=1 // pred_check_branch
      %62 = sbr.rel (0) target = $region37
    $region36: #{dqn_forward.1} parent=1 // pred_region
      %63 = dma.done [#allocation6], 4096
    $region37: #{dqn_forward.1} parent=1 // pred_fallthru
      _
    // Predicated region
    $region38: #{dqn_forward.1} parent=1 // pred_check
      _
    $region39: #{dqn_forward.1} parent=1 // pred_check_branch
      %65 = sbr.rel (0) target = $region41
    $region40: #{dqn_forward.1} parent=1 // pred_region
      %66 = dma.done [#allocation6], 2048
    $region41: #{dqn_forward.1} parent=1 // pred_fallthru
      _
    %68 = vst [vmem:[#allocation2] sm:$0xff] 0
    %v69 = vld [vmem:[%s0] sm:$0xff]
    %v70 = vld [vmem:[%s0 + $0x8] sm:$0xff]
    %v71 = vpack.c.bf16 %v70, %v69
    %vm72 = vcmask 261120
    %73 = vst.msk [vmem:[#allocation2] sm:$0xff] %vm72, %v71
    %v74 = vld [vmem:[#allocation2] sm:$0xff]
    %v75 = vld [vmem:[#allocation3] sm:$0xff]
    %v76 = vld [vmem:[#allocation3 + $0x8] sm:$0xff]
    %v77 = vld [vmem:[#allocation3 + $0x10] sm:$0xff]
    %v78 = vld [vmem:[#allocation3 + $0x18] sm:$0xff]
    %v79 = vld [vmem:[#allocation3 + $0x20] sm:$0xff]
    %v80 = vld [vmem:[#allocation3 + $0x28] sm:$0xff]
    %v81 = vld [vmem:[#allocation3 + $0x30] sm:$0xff]
    %v82 = vld [vmem:[#allocation3 + $0x38] sm:$0xff]
    %v83 = vld [vmem:[#allocation3 + $0x40] sm:$0xff]
    %v84 = vld [vmem:[#allocation3 + $0x48] sm:$0xff]
    %v85 = vld [vmem:[#allocation3 + $0x50] sm:$0xff]
    %v86 = vld [vmem:[#allocation3 + $0x58] sm:$0xff]
    %v87 = vld [vmem:[#allocation3 + $0x60] sm:$0xff]
    %v88 = vld [vmem:[#allocation3 + $0x68] sm:$0xff]
    %v89 = vld [vmem:[#allocation3 + $0x70] sm:$0xff]
    %v90 = vld [vmem:[#allocation3 + $0x78] sm:$0xff]
    %v91 = vld [vmem:[%s2] sm:$0x3]
    %v93 = vlaneseq
    %v94 = vshrl.u32 %v93, 7
    %v95 = vsub.s32 0, %v94
    %v96 = vrot.slane %v91, %v95
    %v97 = vlaneseq
    %v98 = vshrl.u32 %v97, 7
    %v99 = vsub.s32 1, %v98
    %v100 = vrot.slane %v91, %v99
    %v119 = vunpack.c.l.b16 %v75
    %v120 = vunpack.c.h.b16 %v75
    %v121 = vunpack.c.l.b16 %v76
    %v122 = vunpack.c.h.b16 %v76
    %v123 = vunpack.c.l.b16 %v77
    %v124 = vunpack.c.h.b16 %v77
    %v125 = vunpack.c.l.b16 %v78
    %v126 = vunpack.c.h.b16 %v78
    %v127 = vunpack.c.l.b16 %v79
    %v128 = vunpack.c.h.b16 %v79
    %v129 = vunpack.c.l.b16 %v80
    %v130 = vunpack.c.h.b16 %v80
    %v131 = vunpack.c.l.b16 %v81
    %v132 = vunpack.c.h.b16 %v81
    %v133 = vunpack.c.l.b16 %v82
    %v134 = vunpack.c.h.b16 %v82
    %v135 = vunpack.c.l.b16 %v83
    %v136 = vunpack.c.h.b16 %v83
    %v137 = vunpack.c.l.b16 %v84
    %v138 = vunpack.c.h.b16 %v84
    %v139 = vunpack.c.l.b16 %v85
    %v140 = vunpack.c.h.b16 %v85
    %v141 = vunpack.c.l.b16 %v86
    %v142 = vunpack.c.h.b16 %v86
    %v143 = vunpack.c.l.b16 %v87
    %v144 = vunpack.c.h.b16 %v87
    %v145 = vunpack.c.l.b16 %v88
    %v146 = vunpack.c.h.b16 %v88
    %v147 = vunpack.c.l.b16 %v89
    %v148 = vunpack.c.h.b16 %v89
    %v149 = vunpack.c.l.b16 %v90
    %v150 = vunpack.c.h.b16 %v90
    %v151 = vpack.c.b16 %v121, %v119
    %v152 = vpack.c.b16 %v122, %v120
    %v153 = vpack.c.b16 %v125, %v123
    %v154 = vpack.c.b16 %v126, %v124
    %v155 = vpack.c.b16 %v129, %v127
    %v156 = vpack.c.b16 %v130, %v128
    %v157 = vpack.c.b16 %v133, %v131
    %v158 = vpack.c.b16 %v134, %v132
    %v159 = vpack.c.b16 %v137, %v135
    %v160 = vpack.c.b16 %v138, %v136
    %v161 = vpack.c.b16 %v141, %v139
    %v162 = vpack.c.b16 %v142, %v140
    %v163 = vpack.c.b16 %v145, %v143
    %v164 = vpack.c.b16 %v146, %v144
    %v165 = vpack.c.b16 %v149, %v147
    %v166 = vpack.c.b16 %v150, %v148
    %183 = vmatprep.subr.bf16.mxu0 %v152
    %184 = vmatpush1.bf16.msra.mxu0 %v151
    %185 = vmatprep.subr.bf16.mxu0 %v154
    %186 = vmatpush1.bf16.msra.mxu0 %v153
    %187 = vmatprep.subr.bf16.mxu0 %v156
    %188 = vmatpush1.bf16.msra.mxu0 %v155
    %189 = vmatprep.subr.bf16.mxu0 %v158
    %190 = vmatpush1.bf16.msra.mxu0 %v157
    %191 = vmatprep.subr.bf16.mxu0 %v160
    %192 = vmatpush1.bf16.msra.mxu0 %v159
    %193 = vmatprep.subr.bf16.mxu0 %v162
    %194 = vmatpush1.bf16.msra.mxu0 %v161
    %195 = vmatprep.subr.bf16.mxu0 %v164
    %196 = vmatpush1.bf16.msra.mxu0 %v163
    %197 = vmatprep.subr.bf16.mxu0 %v166
    %198 = vmatpush1.bf16.msra.mxu0 %v165
    %199 = vmatprep.subr.bf16.mxu0 0
    %200 = vmatpush1.bf16.msra.mxu0 0
    %201 = vmatprep.subr.bf16.mxu0 0
    %202 = vmatpush1.bf16.msra.mxu0 0
    %203 = vmatprep.subr.bf16.mxu0 0
    %204 = vmatpush1.bf16.msra.mxu0 0
    %205 = vmatprep.subr.bf16.mxu0 0
    %206 = vmatpush1.bf16.msra.mxu0 0
    %207 = vmatprep.subr.bf16.mxu0 0
    %208 = vmatpush1.bf16.msra.mxu0 0
    %209 = vmatprep.subr.bf16.mxu0 0
    %210 = vmatpush1.bf16.msra.mxu0 0
    %211 = vmatprep.subr.bf16.mxu0 0
    %212 = vmatpush1.bf16.msra.mxu0 0
    %213 = vmatprep.subr.bf16.mxu0 0
    %214 = vmatpush1.bf16.msra.mxu0 0
    %215 = vmatprep.mubr.bf16.mxu0 0
    %216 = vmatmul.mubr.bf16.gmra.mrb[0].mxu0 %v74
    %v217 = vpop.f32.mrb[0].mxu0
    %v218 = vadd.f32 %v96, %v217
    %v219 = vpop.f32.mrb[0].mxu0
    %v220 = vadd.f32 %v100, %v219
    %v221 = vpop.f32.mrb[0].mxu0
    %v222 = vadd.f32 %v96, %v221
    %v223 = vpop.f32.mrb[0].mxu0
    %v224 = vadd.f32 %v100, %v223
    %225 = vdwg.mxu0
    %v226 = vmax.f32 %v218, 0.0
    %v227 = vmax.f32 %v220, 0.0
    %v228 = vmax.f32 %v222, 0.0
    %v229 = vmax.f32 %v224, 0.0
    %v230 = vpack.c.bf16 %v228, %v226
    %v231 = vpack.c.bf16 %v229, %v227
    %v232 = vld [vmem:[#allocation5] sm:$0xff]
    %v233 = vld [vmem:[#allocation5 + $0x8] sm:$0xff]
    %v234 = vld [vmem:[#allocation5 + $0x10] sm:$0xff]
    %v235 = vld [vmem:[#allocation5 + $0x18] sm:$0xff]
    %v236 = vld [vmem:[#allocation5 + $0x20] sm:$0xff]
    %v237 = vld [vmem:[#allocation5 + $0x28] sm:$0xff]
    %v238 = vld [vmem:[#allocation5 + $0x30] sm:$0xff]
    %v239 = vld [vmem:[#allocation5 + $0x38] sm:$0xff]
    %v240 = vld [vmem:[#allocation5 + $0x40] sm:$0xff]
    %v241 = vld [vmem:[#allocation5 + $0x48] sm:$0xff]
    %v242 = vld [vmem:[#allocation5 + $0x50] sm:$0xff]
    %v243 = vld [vmem:[#allocation5 + $0x58] sm:$0xff]
    %v244 = vld [vmem:[#allocation5 + $0x60] sm:$0xff]
    %v245 = vld [vmem:[#allocation5 + $0x68] sm:$0xff]
    %v246 = vld [vmem:[#allocation5 + $0x70] sm:$0xff]
    %v247 = vld [vmem:[#allocation5 + $0x78] sm:$0xff]
    %v248 = vld [vmem:[#allocation5 + $0x80] sm:$0xff]
    %v249 = vld [vmem:[#allocation5 + $0x88] sm:$0xff]
    %v250 = vld [vmem:[#allocation5 + $0x90] sm:$0xff]
    %v251 = vld [vmem:[#allocation5 + $0x98] sm:$0xff]
    %v252 = vld [vmem:[#allocation5 + $0xa0] sm:$0xff]
    %v253 = vld [vmem:[#allocation5 + $0xa8] sm:$0xff]
    %v254 = vld [vmem:[#allocation5 + $0xb0] sm:$0xff]
    %v255 = vld [vmem:[#allocation5 + $0xb8] sm:$0xff]
    %v256 = vld [vmem:[#allocation5 + $0xc0] sm:$0xff]
    %v257 = vld [vmem:[#allocation5 + $0xc8] sm:$0xff]
    %v258 = vld [vmem:[#allocation5 + $0xd0] sm:$0xff]
    %v259 = vld [vmem:[#allocation5 + $0xd8] sm:$0xff]
    %v260 = vld [vmem:[#allocation5 + $0xe0] sm:$0xff]
    %v261 = vld [vmem:[#allocation5 + $0xe8] sm:$0xff]
    %v262 = vld [vmem:[#allocation5 + $0xf0] sm:$0xff]
    %v263 = vld [vmem:[#allocation5 + $0xf8] sm:$0xff]
    %v264 = vld [vmem:[%s4] sm:$0x3]
    %v266 = vlaneseq
    %v267 = vshrl.u32 %v266, 7
    %v268 = vsub.s32 0, %v267
    %v269 = vrot.slane %v264, %v268
    %v270 = vlaneseq
    %v271 = vshrl.u32 %v270, 7
    %v272 = vsub.s32 1, %v271
    %v273 = vrot.slane %v264, %v272
    %v308 = vunpack.c.l.b16 %v232
    %v309 = vunpack.c.h.b16 %v232
    %v310 = vunpack.c.l.b16 %v233
    %v311 = vunpack.c.h.b16 %v233
    %v312 = vunpack.c.l.b16 %v234
    %v313 = vunpack.c.h.b16 %v234
    %v314 = vunpack.c.l.b16 %v235
    %v315 = vunpack.c.h.b16 %v235
    %v316 = vunpack.c.l.b16 %v236
    %v317 = vunpack.c.h.b16 %v236
    %v318 = vunpack.c.l.b16 %v237
    %v319 = vunpack.c.h.b16 %v237
    %v320 = vunpack.c.l.b16 %v238
    %v321 = vunpack.c.h.b16 %v238
    %v322 = vunpack.c.l.b16 %v239
    %v323 = vunpack.c.h.b16 %v239
    %v324 = vunpack.c.l.b16 %v240
    %v325 = vunpack.c.h.b16 %v240
    %v326 = vunpack.c.l.b16 %v241
    %v327 = vunpack.c.h.b16 %v241
    %v328 = vunpack.c.l.b16 %v242
    %v329 = vunpack.c.h.b16 %v242
    %v330 = vunpack.c.l.b16 %v243
    %v331 = vunpack.c.h.b16 %v243
    %v332 = vunpack.c.l.b16 %v244
    %v333 = vunpack.c.h.b16 %v244
    %v334 = vunpack.c.l.b16 %v245
    %v335 = vunpack.c.h.b16 %v245
    %v336 = vunpack.c.l.b16 %v246
    %v337 = vunpack.c.h.b16 %v246
    %v338 = vunpack.c.l.b16 %v247
    %v339 = vunpack.c.h.b16 %v247
    %v340 = vunpack.c.l.b16 %v248
    %v341 = vunpack.c.h.b16 %v248
    %v342 = vunpack.c.l.b16 %v249
    %v343 = vunpack.c.h.b16 %v249
    %v344 = vunpack.c.l.b16 %v250
    %v345 = vunpack.c.h.b16 %v250
    %v346 = vunpack.c.l.b16 %v251
    %v347 = vunpack.c.h.b16 %v251
    %v348 = vunpack.c.l.b16 %v252
    %v349 = vunpack.c.h.b16 %v252
    %v350 = vunpack.c.l.b16 %v253
    %v351 = vunpack.c.h.b16 %v253
    %v352 = vunpack.c.l.b16 %v254
    %v353 = vunpack.c.h.b16 %v254
    %v354 = vunpack.c.l.b16 %v255
    %v355 = vunpack.c.h.b16 %v255
    %v356 = vunpack.c.l.b16 %v256
    %v357 = vunpack.c.h.b16 %v256
    %v358 = vunpack.c.l.b16 %v257
    %v359 = vunpack.c.h.b16 %v257
    %v360 = vunpack.c.l.b16 %v258
    %v361 = vunpack.c.h.b16 %v258
    %v362 = vunpack.c.l.b16 %v259
    %v363 = vunpack.c.h.b16 %v259
    %v364 = vunpack.c.l.b16 %v260
    %v365 = vunpack.c.h.b16 %v260
    %v366 = vunpack.c.l.b16 %v261
    %v367 = vunpack.c.h.b16 %v261
    %v368 = vunpack.c.l.b16 %v262
    %v369 = vunpack.c.h.b16 %v262
    %v370 = vunpack.c.l.b16 %v263
    %v371 = vunpack.c.h.b16 %v263
    %v372 = vpack.c.b16 %v310, %v308
    %v373 = vpack.c.b16 %v311, %v309
    %v374 = vpack.c.b16 %v314, %v312
    %v375 = vpack.c.b16 %v315, %v313
    %v376 = vpack.c.b16 %v318, %v316
    %v377 = vpack.c.b16 %v319, %v317
    %v378 = vpack.c.b16 %v322, %v320
    %v379 = vpack.c.b16 %v323, %v321
    %v380 = vpack.c.b16 %v326, %v324
    %v381 = vpack.c.b16 %v327, %v325
    %v382 = vpack.c.b16 %v330, %v328
    %v383 = vpack.c.b16 %v331, %v329
    %v384 = vpack.c.b16 %v334, %v332
    %v385 = vpack.c.b16 %v335, %v333
    %v386 = vpack.c.b16 %v338, %v336
    %v387 = vpack.c.b16 %v339, %v337
    %v388 = vpack.c.b16 %v342, %v340
    %v389 = vpack.c.b16 %v343, %v341
    %v390 = vpack.c.b16 %v346, %v344
    %v391 = vpack.c.b16 %v347, %v345
    %v392 = vpack.c.b16 %v350, %v348
    %v393 = vpack.c.b16 %v351, %v349
    %v394 = vpack.c.b16 %v354, %v352
    %v395 = vpack.c.b16 %v355, %v353
    %v396 = vpack.c.b16 %v358, %v356
    %v397 = vpack.c.b16 %v359, %v357
    %v398 = vpack.c.b16 %v362, %v360
    %v399 = vpack.c.b16 %v363, %v361
    %v400 = vpack.c.b16 %v366, %v364
    %v401 = vpack.c.b16 %v367, %v365
    %v402 = vpack.c.b16 %v370, %v368
    %v403 = vpack.c.b16 %v371, %v369
    %436 = vmatprep.subr.bf16.mxu0 %v373
    %437 = vmatpush1.bf16.msra.mxu0 %v372
    %438 = vmatprep.subr.bf16.mxu0 %v375
    %439 = vmatpush1.bf16.msra.mxu0 %v374
    %440 = vmatprep.subr.bf16.mxu0 %v377
    %441 = vmatpush1.bf16.msra.mxu0 %v376
    %442 = vmatprep.subr.bf16.mxu0 %v379
    %443 = vmatpush1.bf16.msra.mxu0 %v378
    %444 = vmatprep.subr.bf16.mxu0 %v381
    %445 = vmatpush1.bf16.msra.mxu0 %v380
    %446 = vmatprep.subr.bf16.mxu0 %v383
    %447 = vmatpush1.bf16.msra.mxu0 %v382
    %448 = vmatprep.subr.bf16.mxu0 %v385
    %449 = vmatpush1.bf16.msra.mxu0 %v384
    %450 = vmatprep.subr.bf16.mxu0 %v387
    %451 = vmatpush1.bf16.msra.mxu0 %v386
    %452 = vmatprep.subr.bf16.mxu0 %v389
    %453 = vmatpush1.bf16.msra.mxu0 %v388
    %454 = vmatprep.subr.bf16.mxu0 %v391
    %455 = vmatpush1.bf16.msra.mxu0 %v390
    %456 = vmatprep.subr.bf16.mxu0 %v393
    %457 = vmatpush1.bf16.msra.mxu0 %v392
    %458 = vmatprep.subr.bf16.mxu0 %v395
    %459 = vmatpush1.bf16.msra.mxu0 %v394
    %460 = vmatprep.subr.bf16.mxu0 %v397
    %461 = vmatpush1.bf16.msra.mxu0 %v396
    %462 = vmatprep.subr.bf16.mxu0 %v399
    %463 = vmatpush1.bf16.msra.mxu0 %v398
    %464 = vmatprep.subr.bf16.mxu0 %v401
    %465 = vmatpush1.bf16.msra.mxu0 %v400
    %466 = vmatprep.subr.bf16.mxu0 %v403
    %467 = vmatpush1.bf16.msra.mxu0 %v402
    %468 = vmatprep.mubr.bf16.mxu0 %v231
    %469 = vmatmul.mubr.bf16.gmra.mrb[0].mxu0 %v230
    %v470 = vpop.f32.mrb[0].mxu0
    %v471 = vadd.f32 %v269, %v470
    %v472 = vpop.f32.mrb[0].mxu0
    %v473 = vadd.f32 %v273, %v472
    %v474 = vpop.f32.mrb[0].mxu0
    %v475 = vadd.f32 %v269, %v474
    %v476 = vpop.f32.mrb[0].mxu0
    %v477 = vadd.f32 %v273, %v476
    %478 = vdwg.mxu0
    %v479 = vmax.f32 %v471, 0.0
    %v480 = vmax.f32 %v473, 0.0
    %v481 = vmax.f32 %v475, 0.0
    %v482 = vmax.f32 %v477, 0.0
    %v483 = vpack.c.bf16 %v481, %v479
    %v484 = vpack.c.bf16 %v482, %v480
    %v485 = vld [vmem:[#allocation7] sm:$0xf]
    %v486 = vld [vmem:[#allocation7 + $0x4] sm:$0xf]
    %v487 = vld [vmem:[#allocation7 + $0x8] sm:$0xf]
    %v488 = vld [vmem:[#allocation7 + $0xc] sm:$0xf]
    %v489 = vld [vmem:[#allocation7 + $0x10] sm:$0xf]
    %v490 = vld [vmem:[#allocation7 + $0x14] sm:$0xf]
    %v491 = vld [vmem:[#allocation7 + $0x18] sm:$0xf]
    %v492 = vld [vmem:[#allocation7 + $0x1c] sm:$0xf]
    %v493 = vld [vmem:[#allocation7 + $0x20] sm:$0xf]
    %v494 = vld [vmem:[#allocation7 + $0x24] sm:$0xf]
    %v495 = vld [vmem:[#allocation7 + $0x28] sm:$0xf]
    %v496 = vld [vmem:[#allocation7 + $0x2c] sm:$0xf]
    %v497 = vld [vmem:[#allocation7 + $0x30] sm:$0xf]
    %v498 = vld [vmem:[#allocation7 + $0x34] sm:$0xf]
    %v499 = vld [vmem:[#allocation7 + $0x38] sm:$0xf]
    %v500 = vld [vmem:[#allocation7 + $0x3c] sm:$0xf]
    %v501 = vld [vmem:[#allocation7 + $0x40] sm:$0xf]
    %v502 = vld [vmem:[#allocation7 + $0x44] sm:$0xf]
    %v503 = vld [vmem:[#allocation7 + $0x48] sm:$0xf]
    %v504 = vld [vmem:[#allocation7 + $0x4c] sm:$0xf]
    %v505 = vld [vmem:[#allocation7 + $0x50] sm:$0xf]
    %v506 = vld [vmem:[#allocation7 + $0x54] sm:$0xf]
    %v507 = vld [vmem:[#allocation7 + $0x58] sm:$0xf]
    %v508 = vld [vmem:[#allocation7 + $0x5c] sm:$0xf]
    %v509 = vld [vmem:[#allocation7 + $0x60] sm:$0xf]
    %v510 = vld [vmem:[#allocation7 + $0x64] sm:$0xf]
    %v511 = vld [vmem:[#allocation7 + $0x68] sm:$0xf]
    %v512 = vld [vmem:[#allocation7 + $0x6c] sm:$0xf]
    %v513 = vld [vmem:[#allocation7 + $0x70] sm:$0xf]
    %v514 = vld [vmem:[#allocation7 + $0x74] sm:$0xf]
    %v515 = vld [vmem:[#allocation7 + $0x78] sm:$0xf]
    %v516 = vld [vmem:[#allocation7 + $0x7c] sm:$0xf]
    %v517 = vld [vmem:[%s6] sm:$0x1]
    %v519 = vlaneseq
    %v520 = vshrl.u32 %v519, 7
    %v521 = vsub.s32 0, %v520
    %v522 = vrot.slane %v517, %v521
    %v556 = vunpack.c.l.b16 %v485
    %v557 = vunpack.c.l.b16 %v486
    %v558 = vunpack.c.l.b16 %v487
    %v559 = vunpack.c.l.b16 %v488
    %v560 = vunpack.c.l.b16 %v489
    %v561 = vunpack.c.l.b16 %v490
    %v562 = vunpack.c.l.b16 %v491
    %v563 = vunpack.c.l.b16 %v492
    %v564 = vunpack.c.l.b16 %v493
    %v565 = vunpack.c.l.b16 %v494
    %v566 = vunpack.c.l.b16 %v495
    %v567 = vunpack.c.l.b16 %v496
    %v568 = vunpack.c.l.b16 %v497
    %v569 = vunpack.c.l.b16 %v498
    %v570 = vunpack.c.l.b16 %v499
    %v571 = vunpack.c.l.b16 %v500
    %v572 = vunpack.c.l.b16 %v501
    %v573 = vunpack.c.l.b16 %v502
    %v574 = vunpack.c.l.b16 %v503
    %v575 = vunpack.c.l.b16 %v504
    %v576 = vunpack.c.l.b16 %v505
    %v577 = vunpack.c.l.b16 %v506
    %v578 = vunpack.c.l.b16 %v507
    %v579 = vunpack.c.l.b16 %v508
    %v580 = vunpack.c.l.b16 %v509
    %v581 = vunpack.c.l.b16 %v510
    %v582 = vunpack.c.l.b16 %v511
    %v583 = vunpack.c.l.b16 %v512
    %v584 = vunpack.c.l.b16 %v513
    %v585 = vunpack.c.l.b16 %v514
    %v586 = vunpack.c.l.b16 %v515
    %v587 = vunpack.c.l.b16 %v516
    %v588 = vpack.c.b16 %v557, %v556
    %v589 = vpack.c.b16 %v559, %v558
    %v590 = vpack.c.b16 %v561, %v560
    %v591 = vpack.c.b16 %v563, %v562
    %v592 = vpack.c.b16 %v565, %v564
    %v593 = vpack.c.b16 %v567, %v566
    %v594 = vpack.c.b16 %v569, %v568
    %v595 = vpack.c.b16 %v571, %v570
    %v596 = vpack.c.b16 %v573, %v572
    %v597 = vpack.c.b16 %v575, %v574
    %v598 = vpack.c.b16 %v577, %v576
    %v599 = vpack.c.b16 %v579, %v578
    %v600 = vpack.c.b16 %v581, %v580
    %v601 = vpack.c.b16 %v583, %v582
    %v602 = vpack.c.b16 %v585, %v584
    %v603 = vpack.c.b16 %v587, %v586
    %620 = vmatprep.subr.bf16.mxu0 0
    %621 = vmatpush1.bf16.msra.mxu0 %v588
    %622 = vmatprep.subr.bf16.mxu0 0
    %623 = vmatpush1.bf16.msra.mxu0 %v589
    %624 = vmatprep.subr.bf16.mxu0 0
    %625 = vmatpush1.bf16.msra.mxu0 %v590
    %626 = vmatprep.subr.bf16.mxu0 0
    %627 = vmatpush1.bf16.msra.mxu0 %v591
    %628 = vmatprep.subr.bf16.mxu0 0
    %629 = vmatpush1.bf16.msra.mxu0 %v592
    %630 = vmatprep.subr.bf16.mxu0 0
    %631 = vmatpush1.bf16.msra.mxu0 %v593
    %632 = vmatprep.subr.bf16.mxu0 0
    %633 = vmatpush1.bf16.msra.mxu0 %v594
    %634 = vmatprep.subr.bf16.mxu0 0
    %635 = vmatpush1.bf16.msra.mxu0 %v595
    %636 = vmatprep.subr.bf16.mxu0 0
    %637 = vmatpush1.bf16.msra.mxu0 %v596
    %638 = vmatprep.subr.bf16.mxu0 0
    %639 = vmatpush1.bf16.msra.mxu0 %v597
    %640 = vmatprep.subr.bf16.mxu0 0
    %641 = vmatpush1.bf16.msra.mxu0 %v598
    %642 = vmatprep.subr.bf16.mxu0 0
    %643 = vmatpush1.bf16.msra.mxu0 %v599
    %644 = vmatprep.subr.bf16.mxu0 0
    %645 = vmatpush1.bf16.msra.mxu0 %v600
    %646 = vmatprep.subr.bf16.mxu0 0
    %647 = vmatpush1.bf16.msra.mxu0 %v601
    %648 = vmatprep.subr.bf16.mxu0 0
    %649 = vmatpush1.bf16.msra.mxu0 %v602
    %650 = vmatprep.subr.bf16.mxu0 0
    %651 = vmatpush1.bf16.msra.mxu0 %v603
    %652 = vmatprep.mubr.bf16.mxu0 %v484
    %653 = vmatmul.mubr.bf16.gmra.mrb[0].mxu0 %v483
    %v654 = vpop.f32.mrb[0].mxu0
    %v655 = vadd.f32 %v522, %v654
    %v656 = vpop.f32.mrb[0].mxu0
    %v657 = vpop.f32.mrb[0].mxu0
    %v658 = vadd.f32 %v522, %v657
    %v659 = vpop.f32.mrb[0].mxu0
    %660 = vdwg.mxu0
    %vm661 = vcmask 64512
    %662 = vst.msk [vmem:[%s7] sm:$0xff] %vm661, %v655
    %663 = vst.msk [vmem:[%s7 + $0x8] sm:$0xff] %vm661, %v658
    // Predicated region
    $region42: #{dqn_forward.1} parent=1 // pred_check
      _
    $region43: #{dqn_forward.1} parent=1 // pred_check_branch
      %665 = sbr.rel (0) target = $region45
    $region44: #{dqn_forward.1} parent=1 // pred_region
      _
    $region45: #{dqn_forward.1} parent=1 // pred_fallthru
      _
    // Predicated region
    $region46: #{dqn_forward.1} parent=1 // pred_check
      _
    $region47: #{dqn_forward.1} parent=1 // pred_check_branch
      %667 = sbr.rel (0) target = $region49
    $region48: #{dqn_forward.1} parent=1 // pred_region
      _
    $region49: #{dqn_forward.1} parent=1 // pred_fallthru
      _
    %668 = vsyncpa [#allocation4], 1
    %669 = vsyncpa [#allocation6], 1

</llo_original>
